<compile_context>
chip_gen: v7x
topology: tpu7x:2x2x1
jax: 0.10.0
libtpu: 0.0.40
codegen_flags: <defaults>
</compile_context>

<pallas_src>
import math

import jax
import jax.numpy as jnp
import numpy as np
from jax.experimental import pallas as pl
from jax.experimental.pallas import tpu as pltpu


def _round_up(v, m):
    return ((v + m - 1) // m) * m


# ----------------------------------------------------------------------------
# Kernel 1: span scorer  h = sigmoid(x . w + b), lane-dense (B, N) output.
# ----------------------------------------------------------------------------
def _span_scorer_kernel(x_ref, w_ref, b_ref, h_ref):
    # x_ref: (B, N, D) bf16   w_ref: (1, 1, D) f32   b_ref: (1, 1) f32 in SMEM
    # h_ref: (B, N) f32
    x = x_ref[...].astype(jnp.float32)
    s = jnp.sum(x * w_ref[...], axis=-1) + b_ref[0, 0]
    h_ref[...] = jax.nn.sigmoid(s)


def span_scorer(x_bf16, w_span, b_span):
    B, N, D = x_bf16.shape
    w_row = w_span.reshape(1, 1, D).astype(jnp.float32)
    # Whole (B, N, D) slab as one block -- fine for the span counts this module
    # targets (max_sentence_length ~ 40-100); tile over B*N rows if ever huge.
    return pl.pallas_call(
        _span_scorer_kernel,
        out_shape=jax.ShapeDtypeStruct((B, N), jnp.float32),
        grid=(1,),
        in_specs=[
            pl.BlockSpec((B, N, D), lambda i: (0, 0, 0)),
            pl.BlockSpec((1, 1, D), lambda i: (0, 0, 0)),
            pl.BlockSpec(memory_space=pltpu.SMEM),   # scalar bias lives in SMEM
        ],
        out_specs=pl.BlockSpec((B, N), lambda i: (0, 0)),
        compiler_params=pltpu.CompilerParams(dimension_semantics=("arbitrary",)),
    )(x_bf16, w_row, b_span)


# ----------------------------------------------------------------------------
# Kernel 2: pair scorer with hoisted projections.
#   Per batch b (one grid step):
#     u1 = x @ W1 + b               (Mp, C)   -- column-broadcast over j
#     u2 = W2^T @ x^T               (Cp, Mp)  -- row-broadcast over i
#     for each class c:
#       Bc = (x * W3[:, c]) @ x^T   (Mp, Mp)  -- bilinear term, K = D on the MXU
#       s_c = sigmoid(Bc + u1[:, c] + u2[c, :])
#     softmax over the C class slabs (elementwise VPU max/exp/add/mul).
# ----------------------------------------------------------------------------
def _pair_scorer_kernel(xr_ref, xt_ref, w1_ref, w2r_ref, w3r_ref, b_ref, out_ref):
    # xr_ref : (Mp, D) bf16      xt_ref : (D, Mp) bf16
    # w1_ref : (D, C)  bf16      w2r_ref: (Cp, D) bf16    w3r_ref: (Cp, D) f32
    # b_ref  : (1, C)  f32       out_ref: (C, Mp, Mp) f32
    C = out_ref.shape[0]

    x = xr_ref[...]                     # (Mp, D) bf16
    xt = xt_ref[...]                    # (D, Mp) bf16
    x_f32 = x.astype(jnp.float32)

    # Per-span projections (tiny matmuls, hoisted out of the pair loop).
    u1 = jnp.dot(x, w1_ref[...], preferred_element_type=jnp.float32) + b_ref[...]  # (Mp, C)
    u2 = jnp.dot(w2r_ref[...], xt, preferred_element_type=jnp.float32)             # (Cp, Mp)

    w3 = w3r_ref[...]                   # (Cp, D) f32
    s_list = []
    for c in range(C):                  # C is tiny and static -> unrolled
        yc = (x_f32 * w3[c:c + 1, :]).astype(jnp.bfloat16)                  # (Mp, D)
        bil = jnp.dot(yc, xt, preferred_element_type=jnp.float32)           # (Mp, Mp)
        z = bil + u1[:, c:c + 1] + u2[c:c + 1, :]
        s_list.append(jax.nn.sigmoid(z))

    # Softmax over the C class slabs: unrolled elementwise ops on full vregs (VPU).
    m = s_list[0]
    for s in s_list[1:]:
        m = jnp.maximum(m, s)
    e_list = [jnp.exp(s - m) for s in s_list]
    denom = e_list[0]
    for e in e_list[1:]:
        denom = denom + e
    inv = 1.0 / denom                   # exact divide (review correctness note)
    for c in range(C):
        out_ref[c, :, :] = e_list[c] * inv


def pair_scorer(x_ranked_pad, w_pair, b_pair):
    B, Mp, D = x_ranked_pad.shape
    C = w_pair.shape[1]
    Cp = _round_up(C, 8)                # sublane-pad the row-major weight slabs

    xt = jnp.transpose(x_ranked_pad, (0, 2, 1))                     # (B, D, Mp) bf16

    w1 = w_pair[:D].astype(jnp.bfloat16)                            # (D, C)
    w2r = jnp.zeros((Cp, D), jnp.bfloat16).at[:C].set(
        w_pair[D:2 * D].T.astype(jnp.bfloat16))                     # (Cp, D)
    w3r = jnp.zeros((Cp, D), jnp.float32).at[:C].set(
        w_pair[2 * D:].T.astype(jnp.float32))                       # (Cp, D), f32

    return pl.pallas_call(
        _pair_scorer_kernel,
        out_shape=jax.ShapeDtypeStruct((B, C, Mp, Mp), jnp.float32),
        grid=(B,),
        in_specs=[
            pl.BlockSpec((None, Mp, D), lambda b: (b, 0, 0)),   # ranked spans (per batch)
            pl.BlockSpec((None, D, Mp), lambda b: (b, 0, 0)),   # their transpose
            pl.BlockSpec((D, C), lambda b: (0, 0)),             # W1 (resident)
            pl.BlockSpec((Cp, D), lambda b: (0, 0)),            # W2^T (resident)
            pl.BlockSpec((Cp, D), lambda b: (0, 0)),            # W3^T (resident, f32)
            pl.BlockSpec((1, C), lambda b: (0, 0)),             # bias (resident)
        ],
        out_specs=pl.BlockSpec((None, C, Mp, Mp), lambda b: (b, 0, 0, 0)),
        compiler_params=pltpu.CompilerParams(
            dimension_semantics=("parallel",),                  # batch across cores (v7x)
        ),
    )(x_ranked_pad, xt, w1, w2r, w3r, b_pair.astype(jnp.float32))


# ----------------------------------------------------------------------------
# Module wrapper
# ----------------------------------------------------------------------------
class RelationScorerPallas:
    def __init__(self, d_hidden=768, num_of_class=3, k=0.4, key=None):
        if key is None:
            key = jax.random.PRNGKey(0)
        self.k = k
        self.d_hidden = d_hidden
        self.num_of_class = num_of_class
        k1, k2, k3, k4 = jax.random.split(key, 4)
        # PyTorch-Linear-style init (uniform +/- 1/sqrt(fan_in)), stored in
        # (in, out) layout so kernels compute x @ W + b.  Masters kept in f32.
        bound1 = 1.0 / math.sqrt(d_hidden)
        self.w_span = jax.random.uniform(k1, (d_hidden, 1), jnp.float32, -bound1, bound1)
        self.b_span = jax.random.uniform(k2, (1, 1), jnp.float32, -bound1, bound1)
        bound2 = 1.0 / math.sqrt(3 * d_hidden)
        self.w_pair = jax.random.uniform(k3, (3 * d_hidden, num_of_class), jnp.float32,
                                         -bound2, bound2)
        self.b_pair = jax.random.uniform(k4, (1, num_of_class), jnp.float32, -bound2, bound2)
        self.last_top_k_indexes = None
        self._forward_jit = jax.jit(self._device_forward)

    def _num_kept(self, N):
        # Exactly replicates the module's float comparison `value < k * N`
        # over the integer values of the argsort permutation.
        return sum(1 for v in range(N) if v < self.k * N)

    def _device_forward(self, x):
        B, N, D = x.shape
        M = self._num_kept(N)                                  # static under jit
        Mp = max(16, _round_up(M, 16))                         # bf16 sublane packing
        x_bf16 = x.astype(jnp.bfloat16)

        # 1) span scorer (Pallas kernel #1), lane-dense (B, N) output.
        h = span_scorer(x_bf16, self.w_span, self.b_span)      # (B, N) f32

        # 2) top-k span selection, fully on device.  The module keeps rank-slots j
        #    whose descending-argsort *value* is < k*N, in ascending order -- i.e.
        #    the ranks occupied by span positions 0..M-1 (same quirky rule).
        order = jnp.argsort(-h, axis=-1)                       # descending argsort
        inv = jnp.argsort(order, axis=-1)                      # inverse permutation
        sel = jnp.sort(inv[:, :M], axis=-1)                    # (B, M) int32, ascending

        # 3) ranked spans, zero-padded to Mp rows (harmless to the bilinear math:
        #    padded rows/cols are discarded by the pair extraction below).
        x_ranked = jnp.take_along_axis(x_bf16, sel[:, :, None], axis=1)     # (B, M, D)
        x_ranked_pad = jnp.pad(x_ranked, ((0, 0), (0, Mp - M), (0, 0)))     # (B, Mp, D)

        # 4) pair scorer + sigmoid + softmax over the full (i, j) grid (Pallas kernel #2).
        probs = pair_scorer(x_ranked_pad, self.w_pair, self.b_pair)  # (B, C, Mp, Mp)

        # 5) extract the i != j pairs in module order (row-major over (i, j)).
        ii, jj = np.meshgrid(np.arange(M), np.arange(M), indexing="ij")
        mask = ii != jj
        i_flat = jnp.asarray(ii[mask], jnp.int32)
        j_flat = jnp.asarray(jj[mask], jnp.int32)
        logits = probs[:, :, i_flat, j_flat]                   # (B, C, P)
        logits = jnp.transpose(logits, (0, 2, 1))              # (B, P, C)
        return logits, sel

    def forward(self, x, span_ranges):
        B, N, _ = x.shape
        M = self._num_kept(N)
        if M < 2:
            # Guard: no (i, j) pairs possible -> the reference module would crash too.
            raise ValueError("k * num_of_spans selects fewer than 2 spans; no pairs exist.")

        logits, sel = self._forward_jit(x)

        # Host-side bookkeeping only (nested Python lists of range tuples, per the spec).
        sel_np = np.asarray(sel)
        self.last_top_k_indexes = sel_np
        span_ranges_ranked = [[span_ranges[int(j)] for j in sel_np[b]] for b in range(B)]
        pairs = [(i, j) for i in range(M) for j in range(M) if i != j]
        span_pair_ranges = [
            [(span_ranges_ranked[b][i], span_ranges_ranked[b][j]) for (i, j) in pairs]
            for b in range(B)
        ]
        return logits, span_pair_ranges


# ----------------------------------------------------------------------------
# Demo / smoke test
# ----------------------------------------------------------------------------
if __name__ == "__main__":
    key = jax.random.PRNGKey(0)
    kx, kmodel = jax.random.split(key)

    B, N, D, C = 2, 10, 32, 3            # batch, num_spans, d_hidden, num_of_class
    k_frac = 0.4

    x = jax.random.normal(kx, (B, N, D), dtype=jnp.float32)
    span_ranges = [(j, j + 2) for j in range(N)]

    model = RelationScorerPallas(d_hidden=D, num_of_class=C, k=k_frac, key=kmodel)
    logits, span_pair_ranges = model.forward(x, span_ranges)
    logits = jax.block_until_ready(logits)

    M = model._num_kept(N)
    P = M * (M - 1)
    xq = x.astype(jnp.bfloat16).astype(jnp.float32)   # same bf16 activations the kernels see

    # --- structural checks ---------------------------------------------------
    assert logits.shape == (B, P, C)
    assert len(span_pair_ranges) == B and len(span_pair_ranges[0]) == P
    assert span_pair_ranges[0][0] == (span_ranges[int(model.last_top_k_indexes[0, 0])],
                                      span_ranges[int(model.last_top_k_indexes[0, 1])])

    # --- span kernel vs plain JAX --------------------------------------------
    h_k = jax.block_until_ready(span_scorer(x.astype(jnp.bfloat16), model.w_span, model.b_span))
    h_ref = jax.nn.sigmoid(jnp.sum(xq * model.w_span[:, 0], axis=-1) + model.b_span[0, 0])
    assert h_k.shape == (B, N)
    assert jnp.allclose(h_k, h_ref, atol=1e-3)

    # --- pair kernel / end-to-end vs plain JAX --------------------------------
    # Reuse the selection the model actually made (a discrete decision) so the
    # numeric comparison isolates the kernels; tolerance covers bf16 weights/products.
    sel = jnp.asarray(model.last_top_k_indexes)
    xr = jnp.take_along_axis(xq, sel[:, :, None], axis=1)
    pairs = [(i, j) for i in range(M) for j in range(M) if i != j]
    xi = xr[:, jnp.asarray([p[0] for p in pairs]), :]
    xj = xr[:, jnp.asarray([p[1] for p in pairs]), :]
    paired = jnp.concatenate([xi, xj, xi * xj], axis=-1)
    ref = jax.nn.softmax(jax.nn.sigmoid(paired @ model.w_pair + model.b_pair), axis=-1)
    assert jnp.allclose(logits, ref, atol=2e-2, rtol=0.0)
    assert bool(jnp.all(jnp.abs(jnp.sum(logits, axis=-1) - 1.0) < 1e-4))
    assert bool(jnp.all((logits > 0.0) & (logits < 1.0)))

    print("KERNEL_OK")
</pallas_src>

<mosaic_0001>
module attributes {stable_mosaic.version = 11 : i64} {
  func.func @_span_scorer_kernel(%arg0: i32, %arg1: memref<2x10x32xbf16, #tpu.memory_space<vmem>>, %arg2: memref<1x1x32xf32, #tpu.memory_space<vmem>>, %arg3: memref<1x1xf32, #tpu.memory_space<smem>>, %arg4: memref<2x10xf32, #tpu.memory_space<vmem>>) attributes {dimension_semantics = [#tpu.dimension_semantics<arbitrary>], iteration_bounds = array<i64: 1>, scalar_prefetch = 0 : i64, scratch_operands = 0 : i64, tpu.core_type = #tpu.core_type<tc>, window_params = [{pipeline_mode = #tpu.pipeline_mode<synchronous>, transform_indices = @transform_0, window_bounds = array<i64: 2, 10, 32>}, {pipeline_mode = #tpu.pipeline_mode<synchronous>, transform_indices = @transform_1, window_bounds = array<i64: 1, 1, 32>}, {transform_indices = @transform_2, window_bounds = array<i64: 1, 1>}, {pipeline_mode = #tpu.pipeline_mode<synchronous>, transform_indices = @transform_3, window_bounds = array<i64: 2, 10>}]} {
    %c0 = arith.constant 0 : index
    %c0_0 = arith.constant 0 : index
    %c0_1 = arith.constant 0 : index
    %0 = vector.load %arg1[%c0, %c0_0, %c0_1] : memref<2x10x32xbf16, #tpu.memory_space<vmem>>, vector<2x10x32xbf16>
    %1 = arith.extf %0 : vector<2x10x32xbf16> to vector<2x10x32xf32>
    %c0_2 = arith.constant 0 : index
    %c0_3 = arith.constant 0 : index
    %c0_4 = arith.constant 0 : index
    %2 = vector.load %arg2[%c0_2, %c0_3, %c0_4] : memref<1x1x32xf32, #tpu.memory_space<vmem>>, vector<1x1x32xf32>
    %3 = vector.broadcast %2 : vector<1x1x32xf32> to vector<2x10x32xf32>
    %4 = arith.mulf %1, %3 : vector<2x10x32xf32>
    %cst = arith.constant dense<0.000000e+00> : vector<2x10xf32>
    %5 = vector.multi_reduction <add>, %4, %cst [2] : vector<2x10x32xf32> to vector<2x10xf32>
    %c0_5 = arith.constant 0 : index
    %c0_6 = arith.constant 0 : index
    %6 = memref.load %arg3[%c0_5, %c0_6] : memref<1x1xf32, #tpu.memory_space<smem>>
    %7 = vector.broadcast %6 : f32 to vector<2x10xf32>
    %8 = arith.addf %5, %7 : vector<2x10xf32>
    %9 = arith.negf %8 : vector<2x10xf32>
    %10 = math.exp %9 : vector<2x10xf32>
    %cst_7 = arith.constant 1.000000e+00 : f32
    %11 = vector.broadcast %cst_7 : f32 to vector<2x10xf32>
    %12 = arith.addf %11, %10 : vector<2x10xf32>
    %13 = arith.divf %11, %12 : vector<2x10xf32>
    %c0_8 = arith.constant 0 : index
    %c0_9 = arith.constant 0 : index
    %14 = vector.load %arg4[%c0_8, %c0_9] : memref<2x10xf32, #tpu.memory_space<vmem>>, vector<2x10xf32>
    tpu.vector_store %arg4[%c0_8, %c0_9], %13 {strides = array<i32>} : memref<2x10xf32, #tpu.memory_space<vmem>>, vector<2x10xf32>,
    return
  }
  func.func @transform_0(%arg0: i32) -> (i32, i32, i32) {
    %c0_i32 = arith.constant 0 : i32
    %c0_i32_0 = arith.constant 0 : i32
    %c0_i32_1 = arith.constant 0 : i32
    %c0_i32_2 = arith.constant 0 : i32
    return %c0_i32, %c0_i32_0, %c0_i32_1 : i32, i32, i32
  }
  func.func @transform_1(%arg0: i32) -> (i32, i32, i32) {
    %c0_i32 = arith.constant 0 : i32
    %c0_i32_0 = arith.constant 0 : i32
    %c0_i32_1 = arith.constant 0 : i32
    %c0_i32_2 = arith.constant 0 : i32
    return %c0_i32, %c0_i32_0, %c0_i32_1 : i32, i32, i32
  }
  func.func @transform_2(%arg0: i32) -> (i32, i32) {
    %c0_i32 = arith.constant 0 : i32
    %c0_i32_0 = arith.constant 0 : i32
    %c0_i32_1 = arith.constant 0 : i32
    return %c0_i32, %c0_i32_0 : i32, i32
  }
  func.func @transform_3(%arg0: i32) -> (i32, i32) {
    %c0_i32 = arith.constant 0 : i32
    %c0_i32_0 = arith.constant 0 : i32
    %c0_i32_1 = arith.constant 0 : i32
    return %c0_i32, %c0_i32_0 : i32, i32
  }
}

module attributes {stable_mosaic.version = 11 : i64} {
  func.func @_pair_scorer_kernel(%arg0: i32, %arg1: memref<1x16x32xbf16, #tpu.memory_space<vmem>>, %arg2: memref<1x32x16xbf16, #tpu.memory_space<vmem>>, %arg3: memref<32x3xbf16, #tpu.memory_space<vmem>>, %arg4: memref<8x32xbf16, #tpu.memory_space<vmem>>, %arg5: memref<8x32xf32, #tpu.memory_space<vmem>>, %arg6: memref<1x3xf32, #tpu.memory_space<vmem>>, %arg7: memref<1x3x16x16xf32, #tpu.memory_space<vmem>>) attributes {dimension_semantics = [#tpu.dimension_semantics<parallel>], iteration_bounds = array<i64: 2>, scalar_prefetch = 0 : i64, scratch_operands = 0 : i64, tpu.core_type = #tpu.core_type<tc>, window_params = [{transform_indices = @transform_0, window_bounds = array<i64: 1, 16, 32>}, {transform_indices = @transform_1, window_bounds = array<i64: 1, 32, 16>}, {pipeline_mode = #tpu.pipeline_mode<synchronous>, transform_indices = @transform_2, window_bounds = array<i64: 32, 3>}, {pipeline_mode = #tpu.pipeline_mode<synchronous>, transform_indices = @transform_3, window_bounds = array<i64: 8, 32>}, {pipeline_mode = #tpu.pipeline_mode<synchronous>, transform_indices = @transform_4, window_bounds = array<i64: 8, 32>}, {pipeline_mode = #tpu.pipeline_mode<synchronous>, transform_indices = @transform_5, window_bounds = array<i64: 1, 3>}, {transform_indices = @transform_6, window_bounds = array<i64: 1, 3, 16, 16>}]} {
    %c0 = arith.constant 0 : index
    %c0_0 = arith.constant 0 : index
    %c0_1 = arith.constant 0 : index
    %0 = vector.load %arg1[%c0, %c0_0, %c0_1] : memref<1x16x32xbf16, #tpu.memory_space<vmem>>, vector<1x16x32xbf16>
    %1 = vector.shape_cast %0 : vector<1x16x32xbf16> to vector<16x32xbf16>
    %c0_2 = arith.constant 0 : index
    %c0_3 = arith.constant 0 : index
    %c0_4 = arith.constant 0 : index
    %2 = vector.load %arg2[%c0_2, %c0_3, %c0_4] : memref<1x32x16xbf16, #tpu.memory_space<vmem>>, vector<1x32x16xbf16>
    %3 = vector.shape_cast %2 : vector<1x32x16xbf16> to vector<32x16xbf16>
    %4 = arith.extf %1 : vector<16x32xbf16> to vector<16x32xf32>
    %c0_5 = arith.constant 0 : index
    %c0_6 = arith.constant 0 : index
    %5 = vector.load %arg3[%c0_5, %c0_6] : memref<32x3xbf16, #tpu.memory_space<vmem>>, vector<32x3xbf16>
    %cst = arith.constant dense<0.000000e+00> : vector<16x3xf32>
    %6 = tpu.matmul %1, %5, %cst {dimension_numbers = #tpu.dot_dimension_numbers<[1], [0], [0], [1], [0, 0, 1, 1], [], []>} : vector<16x32xbf16>, vector<32x3xbf16>, vector<16x3xf32> -> vector<16x3xf32>
    %c0_7 = arith.constant 0 : index
    %c0_8 = arith.constant 0 : index
    %7 = vector.load %arg6[%c0_7, %c0_8] : memref<1x3xf32, #tpu.memory_space<vmem>>, vector<1x3xf32>
    %8 = vector.broadcast %7 : vector<1x3xf32> to vector<16x3xf32>
    %9 = arith.addf %6, %8 : vector<16x3xf32>
    %c0_9 = arith.constant 0 : index
    %c0_10 = arith.constant 0 : index
    %10 = vector.load %arg4[%c0_9, %c0_10] : memref<8x32xbf16, #tpu.memory_space<vmem>>, vector<8x32xbf16>
    %cst_11 = arith.constant dense<0.000000e+00> : vector<8x16xf32>
    %11 = tpu.matmul %10, %3, %cst_11 {dimension_numbers = #tpu.dot_dimension_numbers<[1], [0], [0], [1], [0, 0, 1, 1], [], []>} : vector<8x32xbf16>, vector<32x16xbf16>, vector<8x16xf32> -> vector<8x16xf32>
    %c0_12 = arith.constant 0 : index
    %c0_13 = arith.constant 0 : index
    %12 = vector.load %arg5[%c0_12, %c0_13] : memref<8x32xf32, #tpu.memory_space<vmem>>, vector<8x32xf32>
    %13 = vector.extract_strided_slice %12 {offsets = [0, 0], sizes = [1, 32], strides = [1, 1]} : vector<8x32xf32> to vector<1x32xf32>
    %14 = vector.broadcast %13 : vector<1x32xf32> to vector<16x32xf32>
    %15 = arith.mulf %4, %14 : vector<16x32xf32>
    %16 = arith.truncf %15 : vector<16x32xf32> to vector<16x32xbf16>
    %cst_14 = arith.constant dense<0.000000e+00> : vector<16x16xf32>
    %17 = tpu.matmul %16, %3, %cst_14 {dimension_numbers = #tpu.dot_dimension_numbers<[1], [0], [0], [1], [0, 0, 1, 1], [], []>} : vector<16x32xbf16>, vector<32x16xbf16>, vector<16x16xf32> -> vector<16x16xf32>
    %18 = vector.extract_strided_slice %9 {offsets = [0, 0], sizes = [16, 1], strides = [1, 1]} : vector<16x3xf32> to vector<16x1xf32>
    %19 = vector.broadcast %18 : vector<16x1xf32> to vector<16x16xf32>
    %20 = arith.addf %17, %19 : vector<16x16xf32>
    %21 = vector.extract_strided_slice %11 {offsets = [0, 0], sizes = [1, 16], strides = [1, 1]} : vector<8x16xf32> to vector<1x16xf32>
    %22 = vector.broadcast %21 : vector<1x16xf32> to vector<16x16xf32>
    %23 = arith.addf %20, %22 : vector<16x16xf32>
    %24 = arith.negf %23 : vector<16x16xf32>
    %25 = math.exp %24 : vector<16x16xf32>
    %cst_15 = arith.constant 1.000000e+00 : f32
    %26 = vector.broadcast %cst_15 : f32 to vector<16x16xf32>
    %27 = arith.addf %26, %25 : vector<16x16xf32>
    %28 = arith.divf %26, %27 : vector<16x16xf32>
    %29 = vector.extract_strided_slice %12 {offsets = [1, 0], sizes = [1, 32], strides = [1, 1]} : vector<8x32xf32> to vector<1x32xf32>
    %30 = vector.broadcast %29 : vector<1x32xf32> to vector<16x32xf32>
    %31 = arith.mulf %4, %30 : vector<16x32xf32>
    %32 = arith.truncf %31 : vector<16x32xf32> to vector<16x32xbf16>
    %cst_16 = arith.constant dense<0.000000e+00> : vector<16x16xf32>
    %33 = tpu.matmul %32, %3, %cst_16 {dimension_numbers = #tpu.dot_dimension_numbers<[1], [0], [0], [1], [0, 0, 1, 1], [], []>} : vector<16x32xbf16>, vector<32x16xbf16>, vector<16x16xf32> -> vector<16x16xf32>
    %34 = vector.extract_strided_slice %9 {offsets = [0, 1], sizes = [16, 1], strides = [1, 1]} : vector<16x3xf32> to vector<16x1xf32>
    %35 = vector.broadcast %34 : vector<16x1xf32> to vector<16x16xf32>
    %36 = arith.addf %33, %35 : vector<16x16xf32>
    %37 = vector.extract_strided_slice %11 {offsets = [1, 0], sizes = [1, 16], strides = [1, 1]} : vector<8x16xf32> to vector<1x16xf32>
    %38 = vector.broadcast %37 : vector<1x16xf32> to vector<16x16xf32>
    %39 = arith.addf %36, %38 : vector<16x16xf32>
    %40 = arith.negf %39 : vector<16x16xf32>
    %41 = math.exp %40 : vector<16x16xf32>
    %cst_17 = arith.constant 1.000000e+00 : f32
    %42 = vector.broadcast %cst_17 : f32 to vector<16x16xf32>
    %43 = arith.addf %42, %41 : vector<16x16xf32>
    %44 = arith.divf %42, %43 : vector<16x16xf32>
    %45 = vector.extract_strided_slice %12 {offsets = [2, 0], sizes = [1, 32], strides = [1, 1]} : vector<8x32xf32> to vector<1x32xf32>
    %46 = vector.broadcast %45 : vector<1x32xf32> to vector<16x32xf32>
    %47 = arith.mulf %4, %46 : vector<16x32xf32>
    %48 = arith.truncf %47 : vector<16x32xf32> to vector<16x32xbf16>
    %cst_18 = arith.constant dense<0.000000e+00> : vector<16x16xf32>
    %49 = tpu.matmul %48, %3, %cst_18 {dimension_numbers = #tpu.dot_dimension_numbers<[1], [0], [0], [1], [0, 0, 1, 1], [], []>} : vector<16x32xbf16>, vector<32x16xbf16>, vector<16x16xf32> -> vector<16x16xf32>
    %50 = vector.extract_strided_slice %9 {offsets = [0, 2], sizes = [16, 1], strides = [1, 1]} : vector<16x3xf32> to vector<16x1xf32>
    %51 = vector.broadcast %50 : vector<16x1xf32> to vector<16x16xf32>
    %52 = arith.addf %49, %51 : vector<16x16xf32>
    %53 = vector.extract_strided_slice %11 {offsets = [2, 0], sizes = [1, 16], strides = [1, 1]} : vector<8x16xf32> to vector<1x16xf32>
    %54 = vector.broadcast %53 : vector<1x16xf32> to vector<16x16xf32>
    %55 = arith.addf %52, %54 : vector<16x16xf32>
    %56 = arith.negf %55 : vector<16x16xf32>
    %57 = math.exp %56 : vector<16x16xf32>
    %cst_19 = arith.constant 1.000000e+00 : f32
    %58 = vector.broadcast %cst_19 : f32 to vector<16x16xf32>
    %59 = arith.addf %58, %57 : vector<16x16xf32>
    %60 = arith.divf %58, %59 : vector<16x16xf32>
    %61 = arith.maximumf %28, %44 : vector<16x16xf32>
    %62 = arith.maximumf %61, %60 : vector<16x16xf32>
    %63 = arith.subf %28, %62 : vector<16x16xf32>
    %64 = math.exp %63 : vector<16x16xf32>
    %65 = arith.subf %44, %62 : vector<16x16xf32>
    %66 = math.exp %65 : vector<16x16xf32>
    %67 = arith.subf %60, %62 : vector<16x16xf32>
    %68 = math.exp %67 : vector<16x16xf32>
    %69 = arith.addf %64, %66 : vector<16x16xf32>
    %70 = arith.addf %69, %68 : vector<16x16xf32>
    %cst_20 = arith.constant 1.000000e+00 : f32
    %71 = vector.broadcast %cst_20 : f32 to vector<16x16xf32>
    %72 = arith.divf %71, %70 : vector<16x16xf32>
    %73 = arith.mulf %64, %72 : vector<16x16xf32>
    %c0_21 = arith.constant 0 : index
    %c0_22 = arith.constant 0 : index
    %c0_23 = arith.constant 0 : index
    %c0_24 = arith.constant 0 : index
    %74 = vector.load %arg7[%c0_21, %c0_22, %c0_23, %c0_24] : memref<1x3x16x16xf32, #tpu.memory_space<vmem>>, vector<1x1x16x16xf32>
    %75 = vector.shape_cast %74 : vector<1x1x16x16xf32> to vector<16x16xf32>
    %76 = vector.shape_cast %73 : vector<16x16xf32> to vector<1x1x16x16xf32>
    tpu.vector_store %arg7[%c0_21, %c0_22, %c0_23, %c0_24], %76 {strides = array<i32>} : memref<1x3x16x16xf32, #tpu.memory_space<vmem>>, vector<1x1x16x16xf32>,
    %77 = arith.mulf %66, %72 : vector<16x16xf32>
    %c0_25 = arith.constant 0 : index
    %c1 = arith.constant 1 : index
    %c0_26 = arith.constant 0 : index
    %c0_27 = arith.constant 0 : index
    %78 = vector.load %arg7[%c0_25, %c1, %c0_26, %c0_27] : memref<1x3x16x16xf32, #tpu.memory_space<vmem>>, vector<1x1x16x16xf32>
    %79 = vector.shape_cast %78 : vector<1x1x16x16xf32> to vector<16x16xf32>
    %80 = vector.shape_cast %77 : vector<16x16xf32> to vector<1x1x16x16xf32>
    tpu.vector_store %arg7[%c0_25, %c1, %c0_26, %c0_27], %80 {strides = array<i32>} : memref<1x3x16x16xf32, #tpu.memory_space<vmem>>, vector<1x1x16x16xf32>,
    %81 = arith.mulf %68, %72 : vector<16x16xf32>
    %c0_28 = arith.constant 0 : index
    %c2 = arith.constant 2 : index
    %c0_29 = arith.constant 0 : index
    %c0_30 = arith.constant 0 : index
    %82 = vector.load %arg7[%c0_28, %c2, %c0_29, %c0_30] : memref<1x3x16x16xf32, #tpu.memory_space<vmem>>, vector<1x1x16x16xf32>
    %83 = vector.shape_cast %82 : vector<1x1x16x16xf32> to vector<16x16xf32>
    %84 = vector.shape_cast %81 : vector<16x16xf32> to vector<1x1x16x16xf32>
    tpu.vector_store %arg7[%c0_28, %c2, %c0_29, %c0_30], %84 {strides = array<i32>} : memref<1x3x16x16xf32, #tpu.memory_space<vmem>>, vector<1x1x16x16xf32>,
    return
  }
  func.func @transform_0(%arg0: i32) -> (i32, i32, i32) {
    %c0_i32 = arith.constant 0 : i32
    %c0_i32_0 = arith.constant 0 : i32
    %c0_i32_1 = arith.constant 0 : i32
    return %arg0, %c0_i32, %c0_i32_0 : i32, i32, i32
  }
  func.func @transform_1(%arg0: i32) -> (i32, i32, i32) {
    %c0_i32 = arith.constant 0 : i32
    %c0_i32_0 = arith.constant 0 : i32
    %c0_i32_1 = arith.constant 0 : i32
    return %arg0, %c0_i32, %c0_i32_0 : i32, i32, i32
  }
  func.func @transform_2(%arg0: i32) -> (i32, i32) {
    %c0_i32 = arith.constant 0 : i32
    %c0_i32_0 = arith.constant 0 : i32
    %c0_i32_1 = arith.constant 0 : i32
    return %c0_i32, %c0_i32_0 : i32, i32
  }
  func.func @transform_3(%arg0: i32) -> (i32, i32) {
    %c0_i32 = arith.constant 0 : i32
    %c0_i32_0 = arith.constant 0 : i32
    %c0_i32_1 = arith.constant 0 : i32
    return %c0_i32, %c0_i32_0 : i32, i32
  }
  func.func @transform_4(%arg0: i32) -> (i32, i32) {
    %c0_i32 = arith.constant 0 : i32
    %c0_i32_0 = arith.constant 0 : i32
    %c0_i32_1 = arith.constant 0 : i32
    return %c0_i32, %c0_i32_0 : i32, i32
  }
  func.func @transform_5(%arg0: i32) -> (i32, i32) {
    %c0_i32 = arith.constant 0 : i32
    %c0_i32_0 = arith.constant 0 : i32
    %c0_i32_1 = arith.constant 0 : i32
    return %c0_i32, %c0_i32_0 : i32, i32
  }
  func.func @transform_6(%arg0: i32) -> (i32, i32, i32, i32) {
    %c0_i32 = arith.constant 0 : i32
    %c0_i32_0 = arith.constant 0 : i32
    %c0_i32_1 = arith.constant 0 : i32
    %c0_i32_2 = arith.constant 0 : i32
    return %arg0, %c0_i32, %c0_i32_0, %c0_i32_1 : i32, i32, i32, i32
  }
}

</mosaic_0001>

<llo_original>
// kernel: neg.1
$region0: #{neg.1}
  #allocation0 [shape = 's32[1]{0}', space=sflag, size = 0x4, scoped, tag = 'scoped memory for neg.1']
  %s0 = inlined_call_operand.vmem [shape: f32[2,10], index: 0, kind: input, shape index: {}]
  %s1 = inlined_call_operand.vmem [shape: f32[2,10], index: 1, kind: output, shape index: {}]
  %v2 = vld [vmem:[%s0] sm:$0x3]
  %3 = xla_tuple %v2
  %4 = xla_tuple %3
  %v5 = vxor.u32 %v2, 2147483648
  %6 = xla_tuple %v5
  %7 = vst [vmem:[%s1] sm:$0x3] %v5

// kernel: _device_forward.2
$region0: #{_device_forward.2}
  #allocation0 [shape = 'u32[]', space=smem, size = 0x4, offset = 0x4, fixed_abs, tag = 'smem constant byte address 0x4 - core index']
  #allocation1 [shape = 'u32[144,128]{1,0:T(1,128)}', space=vmem, size = 0x12000, scoped, tag = 'internal scratch']
  #allocation2 [shape = 'f32[1,1]{1,0:T(1,128)S(6)}', space=smem, size = 0x200, scoped, tag = 'scoped memory for _device_forward.2']
  %s0 = inlined_call_operand.vmem [shape: bf16[2,10,32], index: 0, kind: input, shape index: {}]
  %s1 = inlined_call_operand.vmem [shape: f32[1,1,32], index: 1, kind: input, shape index: {}]
  %s2 = inlined_call_operand.<no memory space> [shape: f32[1,1], index: 2, kind: input, shape index: {}]
  %s3 = inlined_call_operand.vmem [shape: f32[2,10], index: 3, kind: output, shape index: {}]
  %s4 = sld [smem:[#allocation0]]
  $region22: #{_device_forward.2} parent=0
    _
  %s6 = ssub.s32 1, %s4
  %s7 = scalar_select 0, %s6, %s4
  %8 = sst [smem:[#allocation2]] %s2
  // Predicated region
  $region2: #{_device_forward.2} parent=0 // pred_check
    _
  $region3: #{_device_forward.2} parent=0 // pred_check_branch
    %10 = sbr.rel (0) target = $region5
  $region4: #{_device_forward.2} parent=0 // pred_region
    _
  $region5: #{_device_forward.2} parent=0 // pred_fallthru
    _
  // Predicated region
  $region6: #{_device_forward.2} parent=0 // pred_check
    _
  $region7: #{_device_forward.2} parent=0 // pred_check_branch
    %12 = sbr.rel (0) target = $region9
  $region8: #{_device_forward.2} parent=0 // pred_region
    _
  $region9: #{_device_forward.2} parent=0 // pred_fallthru
    _
  // Predicated region
  $region10: #{_device_forward.2} parent=0 // pred_check
    _
  $region11: #{_device_forward.2} parent=0 // pred_check_branch
    %14 = sbr.rel (0) target = $region13
  $region12: #{_device_forward.2} parent=0 // pred_region
    _
  $region13: #{_device_forward.2} parent=0 // pred_fallthru
    _
  %v15 = vld [vmem:[%s0] sm:$0xf]
  %v16 = vld [vmem:[%s0 + $0x4] sm:$0x1]
  %v17 = vld [vmem:[%s0 + $0x8] sm:$0xf]
  %v18 = vld [vmem:[%s0 + $0xc] sm:$0x1]
  %v19 = vunpack.c.l.bf16 %v15
  %v20 = vunpack.c.l.bf16 %v16
  %v21 = vunpack.c.l.bf16 %v17
  %v22 = vunpack.c.l.bf16 %v18
  %v23 = vld [vmem:[%s1] sm:$0x1]
  %v25 = vlaneseq
  %v26 = vshrl.u32 %v25, 7
  %v27 = vsub.s32 0, %v26
  %v28 = vrot.slane %v23, %v27
  %v30 = vmul.f32 %v19, %v28
  %v31 = vmul.f32 %v20, %v28
  %v32 = vmul.f32 %v21, %v28
  %v33 = vmul.f32 %v22, %v28
  %vm34 = vcmask 261120
  %v35 = vsel %vm34, %v30, 0.0
  %36 = vadd.xlane.f32.xlu0 %v35
  %v37 = vpop.xlane.xlu0 %36
  %vm38 = vcmask 254976
  %v39 = vsel %vm38, %v31, 0.0
  %40 = vadd.xlane.f32.xlu0 %v39
  %v41 = vpop.xlane.xlu0 %40
  %v42 = vsel %vm34, %v32, 0.0
  %43 = vadd.xlane.f32.xlu0 %v42
  %v44 = vpop.xlane.xlu0 %43
  %v45 = vsel %vm38, %v33, 0.0
  %46 = vadd.xlane.f32.xlu0 %v45
  %v47 = vpop.xlane.xlu0 %46
  %s48 = sld [smem:[#allocation2]]
  %v49 = vstv %s48
  %v50 = vadd.f32 %v37, %v49
  %v51 = vadd.f32 %v41, %v49
  %v52 = vadd.f32 %v44, %v49
  %v53 = vadd.f32 %v47, %v49
  %v54 = vxor.u32 %v50, 2147483648
  %v55 = vxor.u32 %v51, 2147483648
  %v56 = vxor.u32 %v52, 2147483648
  %v57 = vxor.u32 %v53, 2147483648
  %v58 = vmul.f32 %v54, 1.442695
  %v59 = vpow.pop %v58
  %v60 = vmul.f32 %v55, 1.442695
  %v61 = vpow.pop %v60
  %v62 = vmul.f32 %v56, 1.442695
  %v63 = vpow.pop %v62
  %v64 = vmul.f32 %v57, 1.442695
  %v65 = vpow.pop %v64
  %v66 = vadd.f32 %v59, 1.0
  %v67 = vadd.f32 %v61, 1.0
  %v68 = vadd.f32 %v63, 1.0
  %v69 = vadd.f32 %v65, 1.0
  %v70 = vrcp.pop %v66
  %v71 = vmul.f32 1.0, %v70
  %v72 = vrcp.pop %v67
  %v73 = vmul.f32 1.0, %v72
  %v74 = vrcp.pop %v68
  %v75 = vmul.f32 1.0, %v74
  %v76 = vrcp.pop %v69
  %v77 = vmul.f32 1.0, %v76
  %v82 = vlaneseq
  %v83 = vand.u32 %v82, 127
  %v84 = vlaneseq
  %v85 = vshrl.u32 %v84, 7
  %v86 = vsub.s32 %v83, %v85
  %v87 = vrot.slane %v71, %v86
  %v88 = vadd.s32 %v83, 4294967288
  %v89 = vlaneseq
  %v90 = vshrl.u32 %v89, 7
  %v91 = vsub.s32 %v88, %v90
  %v92 = vrot.slane %v73, %v91
  %vm93 = vcmask 130112
  %v94 = vsel %vm93, %v92, %v87
  %v95 = vlaneseq
  %v96 = vshrl.u32 %v95, 7
  %v97 = vsub.s32 %v83, %v96
  %v98 = vrot.slane %v75, %v97
  %v99 = vlaneseq
  %v100 = vshrl.u32 %v99, 7
  %v101 = vsub.s32 %v88, %v100
  %v102 = vrot.slane %v77, %v101
  %v103 = vsel %vm93, %v102, %v98
  %vm104 = vcmask 1041409
  %v105 = vsel %vm104, %v103, %v94
  %vm107 = vcmask 74752
  %108 = vst.msk [vmem:[%s3] sm:$0x3] %vm107, %v105
  // Predicated region
  $region14: #{_device_forward.2} parent=0 // pred_check
    _
  $region15: #{_device_forward.2} parent=0 // pred_check_branch
    %110 = sbr.rel (0) target = $region17
  $region16: #{_device_forward.2} parent=0 // pred_region
    _
  $region17: #{_device_forward.2} parent=0 // pred_fallthru
    _
  // Predicated region
  $region18: #{_device_forward.2} parent=0 // pred_check
    _
  $region19: #{_device_forward.2} parent=0 // pred_check_branch
    %112 = sbr.rel (0) target = $region21
  $region20: #{_device_forward.2} parent=0 // pred_region
    _
  $region21: #{_device_forward.2} parent=0 // pred_fallthru
    _

// kernel: _device_forward.3
$region0: #{_device_forward.3}
  #allocation0 [shape = 'u32[]', space=smem, size = 0x4, offset = 0x4, fixed_abs, tag = 'smem constant byte address 0x4 - core index']
  #allocation1 [shape = 'u32[144,128]{1,0:T(1,128)}', space=vmem, size = 0x12000, scoped, tag = 'internal scratch']
  %s0 = inlined_call_operand.vmem [shape: bf16[2,16,32], index: 0, kind: input, shape index: {}]
  %s1 = inlined_call_operand.vmem [shape: bf16[2,32,16], index: 1, kind: input, shape index: {}]
  %s2 = inlined_call_operand.vmem [shape: bf16[32,3], index: 2, kind: input, shape index: {}]
  %s3 = inlined_call_operand.vmem [shape: bf16[8,32], index: 3, kind: input, shape index: {}]
  %s4 = inlined_call_operand.vmem [shape: f32[8,32], index: 4, kind: input, shape index: {}]
  %s5 = inlined_call_operand.vmem [shape: f32[1,3], index: 5, kind: input, shape index: {}]
  %s6 = inlined_call_operand.vmem [shape: f32[2,3,16,16], index: 6, kind: output, shape index: {}]
  %s7 = sld [smem:[#allocation0]]
  $region57: #{_device_forward.3} parent=0
    _
  %s9 = ssub.s32 1, %s7
  %s10 = scalar_select 0, %s9, %s7
  loop: start=0, step=1, limit=4
  $region2: #{_device_forward.3} parent=0 // loop_pre_header
    _
  $region3: #{_device_forward.3} parent=0 // loop_header
    %s12 = sphi 0, %s16
    %p13 = scmp.ge.s32.totalorder %s12, 4
    %s22 = sphi 0, %s24
    %s25 = sphi 0, %s22
    %s26 = sphi 0, %s25
    %s42 = sphi 0, %s26
    %s48 = sphi 0, %s50
    %s51 = sphi 0, %s48
    %s52 = sphi 0, %s51
    %s68 = sphi 0, %s52
    %s72 = sphi 0, %s72
    %s74 = sphi 0, %s72
    %s75 = sphi 0, %s74
    %s89 = sphi 0, %s75
    %s93 = sphi 0, %s93
    %s95 = sphi 0, %s93
    %s96 = sphi 0, %s95
    %s110 = sphi 0, %s96
    %s114 = sphi 0, %s114
    %s116 = sphi 0, %s114
    %s117 = sphi 0, %s116
    %s131 = sphi 0, %s117
    %s135 = sphi 0, %s135
    %s137 = sphi 0, %s135
    %s138 = sphi 0, %s137
    %s152 = sphi 0, %s138
    %s158 = sphi 0, %s160
    %s161 = sphi 0, %s158
    %s162 = sphi 0, %s161
    %s178 = sphi 0, %s162
  $region4: #{_device_forward.3} parent=0 // loop_header_branch
    %15 = sbr.rel (%p13) target = $region8
  $region5: #{_device_forward.3} parent=0 // loop_body
    %s17 = ssub.s32 %s12, 1
    %s18 = ssub.s32 %s12, 2
    %s19 = sadd.s32 %s12, 1
    %s20 = ssub.s32 %s12, %s19
    %p21 = scmp.eq.s32.totalorder %s20, 0
    %s23 = sadd.s32 %s22, 1
    %s24 = scalar_select %p21, %s22, %s23
    %p27 = pneg %p21
    %p28 = scmp.eq.s32.totalorder %s12, 1
    %p29 = por %p27, %p28
    %p30 = scmp.ne.s32.totalorder %s22, %s25
    %p31 = scmp.eq.s32.totalorder %s12, 0
    %p32 = por %p30, %p31
    %p33 = scmp.ne.s32.totalorder %s22, %s25
    %p34 = scmp.eq.s32.totalorder %s17, 1
    %p35 = por %p33, %p34
    %p36 = scmp.ne.s32.totalorder %s25, %s26
    %p37 = scmp.eq.s32.totalorder %s17, 0
    %p38 = por %p36, %p37
    %p39 = scmp.ne.s32.totalorder %s25, %s26
    %p40 = scmp.eq.s32.totalorder %s18, 1
    %p41 = por %p39, %p40
    %p43 = scmp.ne.s32.totalorder %s26, %s42
    %p44 = scmp.eq.s32.totalorder %s18, 0
    %p45 = por %p43, %p44
    %s46 = ssub.s32 %s12, %s19
    %p47 = scmp.eq.s32.totalorder %s46, 0
    %s49 = sadd.s32 %s48, 1
    %s50 = scalar_select %p47, %s48, %s49
    %p53 = pneg %p47
    %p54 = scmp.eq.s32.totalorder %s12, 1
    %p55 = por %p53, %p54
    %p56 = scmp.ne.s32.totalorder %s48, %s51
    %p57 = scmp.eq.s32.totalorder %s12, 0
    %p58 = por %p56, %p57
    %p59 = scmp.ne.s32.totalorder %s48, %s51
    %p60 = scmp.eq.s32.totalorder %s17, 1
    %p61 = por %p59, %p60
    %p62 = scmp.ne.s32.totalorder %s51, %s52
    %p63 = scmp.eq.s32.totalorder %s17, 0
    %p64 = por %p62, %p63
    %p65 = scmp.ne.s32.totalorder %s51, %s52
    %p66 = scmp.eq.s32.totalorder %s18, 1
    %p67 = por %p65, %p66
    %p69 = scmp.ne.s32.totalorder %s52, %s68
    %p70 = scmp.eq.s32.totalorder %s18, 0
    %p71 = por %p69, %p70
    %s73 = sadd.s32 %s72, 1
    %p76 = scmp.eq.s32.totalorder %s12, 1
    %p77 = scmp.ne.s32.totalorder %s72, %s74
    %p78 = scmp.eq.s32.totalorder %s12, 0
    %p79 = por %p77, %p78
    %p80 = scmp.ne.s32.totalorder %s72, %s74
    %p81 = scmp.eq.s32.totalorder %s17, 1
    %p82 = por %p80, %p81
    %p83 = scmp.ne.s32.totalorder %s74, %s75
    %p84 = scmp.eq.s32.totalorder %s17, 0
    %p85 = por %p83, %p84
    %p86 = scmp.ne.s32.totalorder %s74, %s75
    %p87 = scmp.eq.s32.totalorder %s18, 1
    %p88 = por %p86, %p87
    %p90 = scmp.ne.s32.totalorder %s75, %s89
    %p91 = scmp.eq.s32.totalorder %s18, 0
    %p92 = por %p90, %p91
    %s94 = sadd.s32 %s93, 1
    %p97 = scmp.eq.s32.totalorder %s12, 1
    %p98 = scmp.ne.s32.totalorder %s93, %s95
    %p99 = scmp.eq.s32.totalorder %s12, 0
    %p100 = por %p98, %p99
    %p101 = scmp.ne.s32.totalorder %s93, %s95
    %p102 = scmp.eq.s32.totalorder %s17, 1
    %p103 = por %p101, %p102
    %p104 = scmp.ne.s32.totalorder %s95, %s96
    %p105 = scmp.eq.s32.totalorder %s17, 0
    %p106 = por %p104, %p105
    %p107 = scmp.ne.s32.totalorder %s95, %s96
    %p108 = scmp.eq.s32.totalorder %s18, 1
    %p109 = por %p107, %p108
    %p111 = scmp.ne.s32.totalorder %s96, %s110
    %p112 = scmp.eq.s32.totalorder %s18, 0
    %p113 = por %p111, %p112
    %s115 = sadd.s32 %s114, 1
    %p118 = scmp.eq.s32.totalorder %s12, 1
    %p119 = scmp.ne.s32.totalorder %s114, %s116
    %p120 = scmp.eq.s32.totalorder %s12, 0
    %p121 = por %p119, %p120
    %p122 = scmp.ne.s32.totalorder %s114, %s116
    %p123 = scmp.eq.s32.totalorder %s17, 1
    %p124 = por %p122, %p123
    %p125 = scmp.ne.s32.totalorder %s116, %s117
    %p126 = scmp.eq.s32.totalorder %s17, 0
    %p127 = por %p125, %p126
    %p128 = scmp.ne.s32.totalorder %s116, %s117
    %p129 = scmp.eq.s32.totalorder %s18, 1
    %p130 = por %p128, %p129
    %p132 = scmp.ne.s32.totalorder %s117, %s131
    %p133 = scmp.eq.s32.totalorder %s18, 0
    %p134 = por %p132, %p133
    %s136 = sadd.s32 %s135, 1
    %p139 = scmp.eq.s32.totalorder %s12, 1
    %p140 = scmp.ne.s32.totalorder %s135, %s137
    %p141 = scmp.eq.s32.totalorder %s12, 0
    %p142 = por %p140, %p141
    %p143 = scmp.ne.s32.totalorder %s135, %s137
    %p144 = scmp.eq.s32.totalorder %s17, 1
    %p145 = por %p143, %p144
    %p146 = scmp.ne.s32.totalorder %s137, %s138
    %p147 = scmp.eq.s32.totalorder %s17, 0
    %p148 = por %p146, %p147
    %p149 = scmp.ne.s32.totalorder %s137, %s138
    %p150 = scmp.eq.s32.totalorder %s18, 1
    %p151 = por %p149, %p150
    %p153 = scmp.ne.s32.totalorder %s138, %s152
    %p154 = scmp.eq.s32.totalorder %s18, 0
    %p155 = por %p153, %p154
    %s156 = ssub.s32 %s12, %s19
    %p157 = scmp.eq.s32.totalorder %s156, 0
    %s159 = sadd.s32 %s158, 1
    %s160 = scalar_select %p157, %s158, %s159
    %p163 = pneg %p157
    %p164 = scmp.eq.s32.totalorder %s12, 1
    %p165 = por %p163, %p164
    %p166 = scmp.ne.s32.totalorder %s158, %s161
    %p167 = scmp.eq.s32.totalorder %s12, 0
    %p168 = por %p166, %p167
    %p169 = scmp.ne.s32.totalorder %s158, %s161
    %p170 = scmp.eq.s32.totalorder %s17, 1
    %p171 = por %p169, %p170
    %p172 = scmp.ne.s32.totalorder %s161, %s162
    %p173 = scmp.eq.s32.totalorder %s17, 0
    %p174 = por %p172, %p173
    %p175 = scmp.ne.s32.totalorder %s161, %s162
    %p176 = scmp.eq.s32.totalorder %s18, 1
    %p177 = por %p175, %p176
    %p179 = scmp.ne.s32.totalorder %s162, %s178
    %p180 = scmp.eq.s32.totalorder %s18, 0
    %p181 = por %p179, %p180
    %p182 = scmp.le.s32.totalorder 1, %s12
    %p183 = scmp.lt.s32.totalorder %s12, 3
    %p184 = pnand %p182, %p183
    %p185 = pneg %p184
    // Predicated region
    $region9: #{_device_forward.3} parent=5 // pred_check
      _
    $region10: #{_device_forward.3} parent=5 // pred_check_branch
      %187 = sbr.rel (%p184) target = $region12
    $region11: #{_device_forward.3} parent=5 // pred_region
      %s188 = ssub.s32 %s12, 1
      // Predicated region
      $region13: #{_device_forward.3} parent=11 // pred_check
        %p189 = pneg %p85
      $region14: #{_device_forward.3} parent=11 // pred_check_branch
        %191 = sbr.rel (%p189) target = $region16
      $region15: #{_device_forward.3} parent=11 // pred_region
        _
      $region16: #{_device_forward.3} parent=11 // pred_fallthru
        _
      // Predicated region
      $region17: #{_device_forward.3} parent=11 // pred_check
        %p192 = pneg %p106
      $region18: #{_device_forward.3} parent=11 // pred_check_branch
        %194 = sbr.rel (%p192) target = $region20
      $region19: #{_device_forward.3} parent=11 // pred_region
        _
      $region20: #{_device_forward.3} parent=11 // pred_fallthru
        _
      // Predicated region
      $region21: #{_device_forward.3} parent=11 // pred_check
        %p195 = pneg %p127
      $region22: #{_device_forward.3} parent=11 // pred_check_branch
        %197 = sbr.rel (%p195) target = $region24
      $region23: #{_device_forward.3} parent=11 // pred_region
        _
      $region24: #{_device_forward.3} parent=11 // pred_fallthru
        _
      // Predicated region
      $region25: #{_device_forward.3} parent=11 // pred_check
        %p198 = pneg %p148
      $region26: #{_device_forward.3} parent=11 // pred_check_branch
        %200 = sbr.rel (%p198) target = $region28
      $region27: #{_device_forward.3} parent=11 // pred_region
        _
      $region28: #{_device_forward.3} parent=11 // pred_fallthru
        _
    $region12: #{_device_forward.3} parent=5 // pred_fallthru
      _
    %p201 = scmp.lt.s32.totalorder %s12, 2
    // Predicated region
    $region29: #{_device_forward.3} parent=5 // pred_check
      %p202 = pneg %p201
    $region30: #{_device_forward.3} parent=5 // pred_check_branch
      %204 = sbr.rel (%p202) target = $region32
    $region31: #{_device_forward.3} parent=5 // pred_region
      // Predicated region
      $region33: #{_device_forward.3} parent=31 // pred_check
        %p205 = pneg %p32
      $region34: #{_device_forward.3} parent=31 // pred_check_branch
        %207 = sbr.rel (%p205) target = $region36
      $region35: #{_device_forward.3} parent=31 // pred_region
        %p208 = scmp.lt.s32.totalorder %s12, 1
        %s209 = scalar_select %p208, %s12, 1
        %s210 = smul.addr %s209, 2
        %s211 = smul.addr %s210, 4
        %s212 = scalar_lea.vmem %s0, %s211
      $region36: #{_device_forward.3} parent=31 // pred_fallthru
        _
      // Predicated region
      $region37: #{_device_forward.3} parent=31 // pred_check
        %p213 = pneg %p58
      $region38: #{_device_forward.3} parent=31 // pred_check_branch
        %215 = sbr.rel (%p213) target = $region40
      $region39: #{_device_forward.3} parent=31 // pred_region
        %p216 = scmp.lt.s32.totalorder %s12, 1
        %s217 = scalar_select %p216, %s12, 1
        %s218 = smul.addr %s217, 4
        %s219 = smul.addr %s218, 4
        %s220 = scalar_lea.vmem %s1, %s219
      $region40: #{_device_forward.3} parent=31 // pred_fallthru
        _
    $region32: #{_device_forward.3} parent=5 // pred_fallthru
      _
    %p221 = scmp.le.s32.totalorder 1, %s12
    %p222 = scmp.lt.s32.totalorder %s12, 3
    %p223 = pnand %p221, %p222
    %p224 = pneg %p223
    // Predicated region
    $region41: #{_device_forward.3} parent=5 // pred_check
      _
    $region42: #{_device_forward.3} parent=5 // pred_check_branch
      %226 = sbr.rel (%p223) target = $region44
    $region43: #{_device_forward.3} parent=5 // pred_region
      %s227 = ssub.s32 %s12, 1
      %p228 = scmp.lt.s32.totalorder %s17, 1
      %s229 = scalar_select %p228, %s17, 1
      %s230 = smul.addr %s229, 2
      %s231 = smul.addr %s230, 4
      %s232 = scalar_lea.vmem %s0, %s231
      %p233 = pneg %p38
      %p234 = pneg %p35
      %p235 = scmp.lt.s32.totalorder %s17, 1
      %s236 = scalar_select %p235, %s17, 1
      %s237 = smul.addr %s236, 4
      %s238 = smul.addr %s237, 4
      %s239 = scalar_lea.vmem %s1, %s238
      %p240 = pneg %p64
      %p241 = pneg %p61
      %p242 = pneg %p85
      %p243 = pneg %p82
      %p244 = pneg %p106
      %p245 = pneg %p103
      %p246 = pneg %p127
      %p247 = pneg %p124
      %p248 = pneg %p148
      %p249 = pneg %p145
      %p250 = pneg %p174
      %p251 = pneg %p171
      %p252 = scmp.lt.s32.totalorder %s17, 1
      %s253 = scalar_select %p252, %s17, 1
      %s254 = smul.addr %s253, 6
      %s255 = smul.addr %s254, 8
      %s256 = scalar_lea.vmem %s6, %s255
      %p257 = scmp.lt.s32.totalorder %s17, 1
      %s258 = scalar_select %p257, %s17, 1
      %s259 = smul.addr %s258, 2
      %s260 = smul.addr %s259, 4
      %s261 = scalar_lea.vmem %s0, %s260
      %p262 = scmp.lt.s32.totalorder %s17, 1
      %s263 = scalar_select %p262, %s17, 1
      %s264 = smul.addr %s263, 4
      %s265 = smul.addr %s264, 4
      %s266 = scalar_lea.vmem %s1, %s265
      %p267 = scmp.lt.s32.totalorder %s17, 1
      %s268 = scalar_select %p267, %s17, 1
      %s269 = smul.addr %s268, 6
      %s270 = smul.addr %s269, 8
      %s271 = scalar_lea.vmem %s6, %s270
      %v273 = vld [vmem:[%s261] sm:$0xf]
      %v274 = vld [vmem:[%s261 + $0x4] sm:$0xf]
      %v275 = vld [vmem:[%s266] sm:$0xf]
      %v276 = vld [vmem:[%s266 + $0x4] sm:$0xf]
      %v277 = vld [vmem:[%s266 + $0x8] sm:$0xf]
      %v278 = vld [vmem:[%s266 + $0xc] sm:$0xf]
      %v279 = vunpack.c.l.bf16 %v273
      %v280 = vunpack.c.l.bf16 %v274
      %v281 = vld [vmem:[%s2] sm:$0xf]
      %v282 = vld [vmem:[%s2 + $0x4] sm:$0xf]
      %v283 = vld [vmem:[%s2 + $0x8] sm:$0xf]
      %v284 = vld [vmem:[%s2 + $0xc] sm:$0xf]
      %v285 = vld [vmem:[%s5] sm:$0x1]
      %v287 = vlaneseq
      %v288 = vshrl.u32 %v287, 7
      %v289 = vsub.s32 0, %v288
      %v290 = vrot.slane %v285, %v289
      %v294 = vunpack.c.l.b16 %v273
      %v295 = vunpack.c.l.b16 %v274
      %v296 = vpack.c.b16 %v295, %v294
      %v301 = vunpack.c.l.b16 %v281
      %v302 = vunpack.c.l.b16 %v282
      %v303 = vunpack.c.l.b16 %v283
      %v304 = vunpack.c.l.b16 %v284
      %v305 = vpack.c.b16 %v302, %v301
      %v306 = vpack.c.b16 %v304, %v303
      %vm309 = vcmask 261120
      %v311 = vsel %vm309, %v296, 0
      %313 = vmatprep.subr.bf16.mxu0 0
      %314 = vmatpush1.bf16.msra.mxu0 %v305
      %315 = vmatprep.subr.bf16.mxu0 0
      %316 = vmatpush1.bf16.msra.mxu0 %v306
      %317 = vmatprep.subr.bf16.mxu0 0
      %318 = vmatpush1.bf16.msra.mxu0 0
      %319 = vmatprep.subr.bf16.mxu0 0
      %320 = vmatpush1.bf16.msra.mxu0 0
      %321 = vmatprep.subr.bf16.mxu0 0
      %322 = vmatpush1.bf16.msra.mxu0 0
      %323 = vmatprep.subr.bf16.mxu0 0
      %324 = vmatpush1.bf16.msra.mxu0 0
      %325 = vmatprep.subr.bf16.mxu0 0
      %326 = vmatpush1.bf16.msra.mxu0 0
      %327 = vmatprep.subr.bf16.mxu0 0
      %328 = vmatpush1.bf16.msra.mxu0 0
      %329 = vmatprep.subr.bf16.mxu0 0
      %330 = vmatpush1.bf16.msra.mxu0 0
      %331 = vmatprep.subr.bf16.mxu0 0
      %332 = vmatpush1.bf16.msra.mxu0 0
      %333 = vmatprep.subr.bf16.mxu0 0
      %334 = vmatpush1.bf16.msra.mxu0 0
      %335 = vmatprep.subr.bf16.mxu0 0
      %336 = vmatpush1.bf16.msra.mxu0 0
      %337 = vmatprep.subr.bf16.mxu0 0
      %338 = vmatpush1.bf16.msra.mxu0 0
      %339 = vmatprep.subr.bf16.mxu0 0
      %340 = vmatpush1.bf16.msra.mxu0 0
      %341 = vmatprep.subr.bf16.mxu0 0
      %342 = vmatpush1.bf16.msra.mxu0 0
      %343 = vmatprep.subr.bf16.mxu0 0
      %344 = vmatpush1.bf16.msra.mxu0 0
      %345 = vmatprep.mubr.bf16.mxu0 0
      %346 = vmatmul.mubr.bf16.gmra.mrb[0].mxu0 %v311
      %v347 = vpop.f32.mrb[0].mxu0
      %v348 = vadd.f32 %v290, %v347
      %v349 = vpop.f32.mrb[0].mxu0
      %v350 = vpop.f32.mrb[0].mxu0
      %v351 = vadd.f32 %v290, %v350
      %v352 = vpop.f32.mrb[0].mxu0
      %353 = vdwg.mxu0
      %v354 = vld [vmem:[%s3] sm:$0xf]
      %v359 = vunpack.c.l.b16 %v275
      %v360 = vunpack.c.l.b16 %v276
      %v361 = vunpack.c.l.b16 %v277
      %v362 = vunpack.c.l.b16 %v278
      %v363 = vpack.c.b16 %v360, %v359
      %v364 = vpack.c.b16 %v362, %v361
      %v368 = vsel %vm309, %v354, 0
      %370 = vmatprep.subr.bf16.mxu0 0
      %371 = vmatpush1.bf16.msra.mxu0 %v363
      %372 = vmatprep.subr.bf16.mxu0 0
      %373 = vmatpush1.bf16.msra.mxu0 %v364
      %374 = vmatprep.subr.bf16.mxu0 0
      %375 = vmatpush1.bf16.msra.mxu0 0
      %376 = vmatprep.subr.bf16.mxu0 0
      %377 = vmatpush1.bf16.msra.mxu0 0
      %378 = vmatprep.subr.bf16.mxu0 0
      %379 = vmatpush1.bf16.msra.mxu0 0
      %380 = vmatprep.subr.bf16.mxu0 0
      %381 = vmatpush1.bf16.msra.mxu0 0
      %382 = vmatprep.subr.bf16.mxu0 0
      %383 = vmatpush1.bf16.msra.mxu0 0
      %384 = vmatprep.subr.bf16.mxu0 0
      %385 = vmatpush1.bf16.msra.mxu0 0
      %386 = vmatprep.subr.bf16.mxu0 0
      %387 = vmatpush1.bf16.msra.mxu0 0
      %388 = vmatprep.subr.bf16.mxu0 0
      %389 = vmatpush1.bf16.msra.mxu0 0
      %390 = vmatprep.subr.bf16.mxu0 0
      %391 = vmatpush1.bf16.msra.mxu0 0
      %392 = vmatprep.subr.bf16.mxu0 0
      %393 = vmatpush1.bf16.msra.mxu0 0
      %394 = vmatprep.subr.bf16.mxu0 0
      %395 = vmatpush1.bf16.msra.mxu0 0
      %396 = vmatprep.subr.bf16.mxu0 0
      %397 = vmatpush1.bf16.msra.mxu0 0
      %398 = vmatprep.subr.bf16.mxu0 0
      %399 = vmatpush1.bf16.msra.mxu0 0
      %400 = vmatprep.subr.bf16.mxu0 0
      %401 = vmatpush1.bf16.msra.mxu0 0
      %402 = vmatprep.mubr.bf16.mxu0 0
      %403 = vmatmul.mubr.bf16.gmra.mrb[0].mxu0 %v368
      %v404 = vpop.f32.mrb[0].mxu0
      %v405 = vadd.f32 0.0, %v404
      %v406 = vpop.f32.mrb[0].mxu0
      %v407 = vpop.f32.mrb[0].mxu0
      %v408 = vpop.f32.mrb[0].mxu0
      %409 = vdwg.mxu0
      %v410 = vld [vmem:[%s4] sm:$0xff]
      %v411 = vlaneseq
      %v412 = vshrl.u32 %v411, 7
      %v413 = vsub.s32 0, %v412
      %v414 = vrot.slane %v410, %v413
      %v415 = vmul.f32 %v279, %v414
      %v416 = vmul.f32 %v280, %v414
      %v417 = vpack.c.bf16 %v416, %v415
      %419 = vset.pattern.permute.xlu0 0
      %420 = vperm.xlu0 %419, %v348
      %v421 = vpop.permute.xlu0 %420
      %424 = vset.pattern.permute.xlu0 0
      %425 = vperm.xlu0 %424, %v351
      %v426 = vpop.permute.xlu0 %425
      %v429 = vsel %vm309, %v417, 0
      %431 = vmatprep.subr.bf16.mxu0 0
      %432 = vmatpush1.bf16.msra.mxu0 %v363
      %433 = vmatprep.subr.bf16.mxu0 0
      %434 = vmatpush1.bf16.msra.mxu0 %v364
      %435 = vmatprep.subr.bf16.mxu0 0
      %436 = vmatpush1.bf16.msra.mxu0 0
      %437 = vmatprep.subr.bf16.mxu0 0
      %438 = vmatpush1.bf16.msra.mxu0 0
      %439 = vmatprep.subr.bf16.mxu0 0
      %440 = vmatpush1.bf16.msra.mxu0 0
      %441 = vmatprep.subr.bf16.mxu0 0
      %442 = vmatpush1.bf16.msra.mxu0 0
      %443 = vmatprep.subr.bf16.mxu0 0
      %444 = vmatpush1.bf16.msra.mxu0 0
      %445 = vmatprep.subr.bf16.mxu0 0
      %446 = vmatpush1.bf16.msra.mxu0 0
      %447 = vmatprep.subr.bf16.mxu0 0
      %448 = vmatpush1.bf16.msra.mxu0 0
      %449 = vmatprep.subr.bf16.mxu0 0
      %450 = vmatpush1.bf16.msra.mxu0 0
      %451 = vmatprep.subr.bf16.mxu0 0
      %452 = vmatpush1.bf16.msra.mxu0 0
      %453 = vmatprep.subr.bf16.mxu0 0
      %454 = vmatpush1.bf16.msra.mxu0 0
      %455 = vmatprep.subr.bf16.mxu0 0
      %456 = vmatpush1.bf16.msra.mxu0 0
      %457 = vmatprep.subr.bf16.mxu0 0
      %458 = vmatpush1.bf16.msra.mxu0 0
      %459 = vmatprep.subr.bf16.mxu0 0
      %460 = vmatpush1.bf16.msra.mxu0 0
      %461 = vmatprep.subr.bf16.mxu0 0
      %462 = vmatpush1.bf16.msra.mxu0 0
      %463 = vmatprep.mubr.bf16.mxu0 0
      %464 = vmatmul.mubr.bf16.gmra.mrb[0].mxu0 %v429
      %v465 = vpop.f32.mrb[0].mxu0
      %v466 = vadd.f32 %v421, %v465
      %v467 = vpop.f32.mrb[0].mxu0
      %v468 = vpop.f32.mrb[0].mxu0
      %v469 = vadd.f32 %v426, %v468
      %v470 = vpop.f32.mrb[0].mxu0
      %471 = vdwg.mxu0
      %v472 = vlaneseq
      %v473 = vshrl.u32 %v472, 7
      %v474 = vsub.s32 0, %v473
      %v475 = vrot.slane %v405, %v474
      %v476 = vadd.f32 %v466, %v475
      %v477 = vadd.f32 %v469, %v475
      %v478 = vxor.u32 %v476, 2147483648
      %v479 = vxor.u32 %v477, 2147483648
      %v480 = vmul.f32 %v478, 1.442695
      %v481 = vpow.pop %v480
      %v482 = vmul.f32 %v479, 1.442695
      %v483 = vpow.pop %v482
      %v484 = vadd.f32 %v481, 1.0
      %v485 = vadd.f32 %v483, 1.0
      %v486 = vrcp.pop %v484
      %v487 = vmul.f32 1.0, %v486
      %v488 = vrcp.pop %v485
      %v489 = vmul.f32 1.0, %v488
      %v490 = vlaneseq
      %v491 = vshrl.u32 %v490, 7
      %v492 = vsub.s32 1, %v491
      %v493 = vrot.slane %v410, %v492
      %v494 = vmul.f32 %v279, %v493
      %v495 = vmul.f32 %v280, %v493
      %v496 = vpack.c.bf16 %v495, %v494
      %497 = vset.pattern.permute.xlu0 1
      %498 = vperm.xlu0 %497, %v348
      %v499 = vpop.permute.xlu0 %498
      %501 = vset.pattern.permute.xlu0 1
      %502 = vperm.xlu0 %501, %v351
      %v503 = vpop.permute.xlu0 %502
      %v506 = vsel %vm309, %v496, 0
      %508 = vmatprep.subr.bf16.mxu0 0
      %509 = vmatpush1.bf16.msra.mxu0 %v363
      %510 = vmatprep.subr.bf16.mxu0 0
      %511 = vmatpush1.bf16.msra.mxu0 %v364
      %512 = vmatprep.subr.bf16.mxu0 0
      %513 = vmatpush1.bf16.msra.mxu0 0
      %514 = vmatprep.subr.bf16.mxu0 0
      %515 = vmatpush1.bf16.msra.mxu0 0
      %516 = vmatprep.subr.bf16.mxu0 0
      %517 = vmatpush1.bf16.msra.mxu0 0
      %518 = vmatprep.subr.bf16.mxu0 0
      %519 = vmatpush1.bf16.msra.mxu0 0
      %520 = vmatprep.subr.bf16.mxu0 0
      %521 = vmatpush1.bf16.msra.mxu0 0
      %522 = vmatprep.subr.bf16.mxu0 0
      %523 = vmatpush1.bf16.msra.mxu0 0
      %524 = vmatprep.subr.bf16.mxu0 0
      %525 = vmatpush1.bf16.msra.mxu0 0
      %526 = vmatprep.subr.bf16.mxu0 0
      %527 = vmatpush1.bf16.msra.mxu0 0
      %528 = vmatprep.subr.bf16.mxu0 0
      %529 = vmatpush1.bf16.msra.mxu0 0
      %530 = vmatprep.subr.bf16.mxu0 0
      %531 = vmatpush1.bf16.msra.mxu0 0
      %532 = vmatprep.subr.bf16.mxu0 0
      %533 = vmatpush1.bf16.msra.mxu0 0
      %534 = vmatprep.subr.bf16.mxu0 0
      %535 = vmatpush1.bf16.msra.mxu0 0
      %536 = vmatprep.subr.bf16.mxu0 0
      %537 = vmatpush1.bf16.msra.mxu0 0
      %538 = vmatprep.subr.bf16.mxu0 0
      %539 = vmatpush1.bf16.msra.mxu0 0
      %540 = vmatprep.mubr.bf16.mxu0 0
      %541 = vmatmul.mubr.bf16.gmra.mrb[0].mxu0 %v506
      %v542 = vpop.f32.mrb[0].mxu0
      %v543 = vadd.f32 %v499, %v542
      %v544 = vpop.f32.mrb[0].mxu0
      %v545 = vpop.f32.mrb[0].mxu0
      %v546 = vadd.f32 %v503, %v545
      %v547 = vpop.f32.mrb[0].mxu0
      %548 = vdwg.mxu0
      %v549 = vlaneseq
      %v550 = vshrl.u32 %v549, 7
      %v551 = vsub.s32 1, %v550
      %v552 = vrot.slane %v405, %v551
      %v553 = vadd.f32 %v543, %v552
      %v554 = vadd.f32 %v546, %v552
      %v555 = vxor.u32 %v553, 2147483648
      %v556 = vxor.u32 %v554, 2147483648
      %v557 = vmul.f32 %v555, 1.442695
      %v558 = vpow.pop %v557
      %v559 = vmul.f32 %v556, 1.442695
      %v560 = vpow.pop %v559
      %v561 = vadd.f32 %v558, 1.0
      %v562 = vadd.f32 %v560, 1.0
      %v563 = vrcp.pop %v561
      %v564 = vmul.f32 1.0, %v563
      %v565 = vrcp.pop %v562
      %v566 = vmul.f32 1.0, %v565
      %v567 = vlaneseq
      %v568 = vshrl.u32 %v567, 7
      %v569 = vsub.s32 2, %v568
      %v570 = vrot.slane %v410, %v569
      %v571 = vmul.f32 %v279, %v570
      %v572 = vmul.f32 %v280, %v570
      %v573 = vpack.c.bf16 %v572, %v571
      %574 = vset.pattern.permute.xlu0 2
      %575 = vperm.xlu0 %574, %v348
      %v576 = vpop.permute.xlu0 %575
      %578 = vset.pattern.permute.xlu0 2
      %579 = vperm.xlu0 %578, %v351
      %v580 = vpop.permute.xlu0 %579
      %v583 = vsel %vm309, %v573, 0
      %585 = vmatprep.subr.bf16.mxu0 0
      %586 = vmatpush1.bf16.msra.mxu0 %v363
      %587 = vmatprep.subr.bf16.mxu0 0
      %588 = vmatpush1.bf16.msra.mxu0 %v364
      %589 = vmatprep.subr.bf16.mxu0 0
      %590 = vmatpush1.bf16.msra.mxu0 0
      %591 = vmatprep.subr.bf16.mxu0 0
      %592 = vmatpush1.bf16.msra.mxu0 0
      %593 = vmatprep.subr.bf16.mxu0 0
      %594 = vmatpush1.bf16.msra.mxu0 0
      %595 = vmatprep.subr.bf16.mxu0 0
      %596 = vmatpush1.bf16.msra.mxu0 0
      %597 = vmatprep.subr.bf16.mxu0 0
      %598 = vmatpush1.bf16.msra.mxu0 0
      %599 = vmatprep.subr.bf16.mxu0 0
      %600 = vmatpush1.bf16.msra.mxu0 0
      %601 = vmatprep.subr.bf16.mxu0 0
      %602 = vmatpush1.bf16.msra.mxu0 0
      %603 = vmatprep.subr.bf16.mxu0 0
      %604 = vmatpush1.bf16.msra.mxu0 0
      %605 = vmatprep.subr.bf16.mxu0 0
      %606 = vmatpush1.bf16.msra.mxu0 0
      %607 = vmatprep.subr.bf16.mxu0 0
      %608 = vmatpush1.bf16.msra.mxu0 0
      %609 = vmatprep.subr.bf16.mxu0 0
      %610 = vmatpush1.bf16.msra.mxu0 0
      %611 = vmatprep.subr.bf16.mxu0 0
      %612 = vmatpush1.bf16.msra.mxu0 0
      %613 = vmatprep.subr.bf16.mxu0 0
      %614 = vmatpush1.bf16.msra.mxu0 0
      %615 = vmatprep.subr.bf16.mxu0 0
      %616 = vmatpush1.bf16.msra.mxu0 0
      %617 = vmatprep.mubr.bf16.mxu0 0
      %618 = vmatmul.mubr.bf16.gmra.mrb[0].mxu0 %v583
      %v619 = vpop.f32.mrb[0].mxu0
      %v620 = vadd.f32 %v576, %v619
      %v621 = vpop.f32.mrb[0].mxu0
      %v622 = vpop.f32.mrb[0].mxu0
      %v623 = vadd.f32 %v580, %v622
      %v624 = vpop.f32.mrb[0].mxu0
      %625 = vdwg.mxu0
      %v626 = vlaneseq
      %v627 = vshrl.u32 %v626, 7
      %v628 = vsub.s32 2, %v627
      %v629 = vrot.slane %v405, %v628
      %v630 = vadd.f32 %v620, %v629
      %v631 = vadd.f32 %v623, %v629
      %v632 = vxor.u32 %v630, 2147483648
      %v633 = vxor.u32 %v631, 2147483648
      %v634 = vmul.f32 %v632, 1.442695
      %v635 = vpow.pop %v634
      %v636 = vmul.f32 %v633, 1.442695
      %v637 = vpow.pop %v636
      %v638 = vadd.f32 %v635, 1.0
      %v639 = vadd.f32 %v637, 1.0
      %v640 = vrcp.pop %v638
      %v641 = vmul.f32 1.0, %v640
      %v642 = vrcp.pop %v639
      %v643 = vmul.f32 1.0, %v642
      %v644 = vmax.f32 %v487, %v564
      %v645 = vmax.f32 %v489, %v566
      %v646 = vmax.f32 %v644, %v641
      %v647 = vmax.f32 %v645, %v643
      %v648 = vsub.f32 %v487, %v646
      %v649 = vsub.f32 %v489, %v647
      %v650 = vmul.f32 %v648, 1.442695
      %v651 = vpow.pop %v650
      %v652 = vmul.f32 %v649, 1.442695
      %v653 = vpow.pop %v652
      %v654 = vsub.f32 %v564, %v646
      %v655 = vsub.f32 %v566, %v647
      %v656 = vmul.f32 %v654, 1.442695
      %v657 = vpow.pop %v656
      %v658 = vmul.f32 %v655, 1.442695
      %v659 = vpow.pop %v658
      %v660 = vsub.f32 %v641, %v646
      %v661 = vsub.f32 %v643, %v647
      %v662 = vmul.f32 %v660, 1.442695
      %v663 = vpow.pop %v662
      %v664 = vmul.f32 %v661, 1.442695
      %v665 = vpow.pop %v664
      %v666 = vadd.f32 %v651, %v657
      %v667 = vadd.f32 %v653, %v659
      %v668 = vadd.f32 %v666, %v663
      %v669 = vadd.f32 %v667, %v665
      %v670 = vrcp.pop %v668
      %v671 = vmul.f32 1.0, %v670
      %v672 = vrcp.pop %v669
      %v673 = vmul.f32 1.0, %v672
      %v674 = vmul.f32 %v651, %v671
      %v675 = vmul.f32 %v653, %v673
      %vm676 = vcmask 130048
      %677 = vst.msk [vmem:[%s271] sm:$0xff] %vm676, %v674
      %678 = vst.msk [vmem:[%s271 + $0x8] sm:$0xff] %vm676, %v675
      %v679 = vmul.f32 %v657, %v671
      %v680 = vmul.f32 %v659, %v673
      %s681 = scalar_lea.vmem %s271, 16
      %682 = vst.msk [vmem:[%s681] sm:$0xff] %vm676, %v679
      %683 = vst.msk [vmem:[%s681 + $0x8] sm:$0xff] %vm676, %v680
      %v684 = vmul.f32 %v663, %v671
      %v685 = vmul.f32 %v665, %v673
      %s686 = scalar_lea.vmem %s271, 32
      %687 = vst.msk [vmem:[%s686] sm:$0xff] %vm676, %v684
      %688 = vst.msk [vmem:[%s686 + $0x8] sm:$0xff] %vm676, %v685
      %p689 = scmp.lt.s32.totalorder %s17, 1
      %s690 = scalar_select %p689, %s17, 1
      %s691 = smul.addr %s690, 6
      %s692 = smul.addr %s691, 8
      %s693 = scalar_lea.vmem %s6, %s692
      // Predicated region
      $region45: #{_device_forward.3} parent=43 // pred_check
        %p694 = pneg %p171
      $region46: #{_device_forward.3} parent=43 // pred_check_branch
        %696 = sbr.rel (%p694) target = $region48
      $region47: #{_device_forward.3} parent=43 // pred_region
        _
      $region48: #{_device_forward.3} parent=43 // pred_fallthru
        _
    $region44: #{_device_forward.3} parent=5 // pred_fallthru
      _
    %p697 = scmp.le.s32.totalorder 2, %s12
    // Predicated region
    $region49: #{_device_forward.3} parent=5 // pred_check
      %p698 = pneg %p697
    $region50: #{_device_forward.3} parent=5 // pred_check_branch
      %700 = sbr.rel (%p698) target = $region52
    $region51: #{_device_forward.3} parent=5 // pred_region
      %s701 = ssub.s32 %s12, 2
      // Predicated region
      $region53: #{_device_forward.3} parent=51 // pred_check
        %p702 = pneg %p177
      $region54: #{_device_forward.3} parent=51 // pred_check_branch
        %704 = sbr.rel (%p702) target = $region56
      $region55: #{_device_forward.3} parent=51 // pred_region
        %p705 = scmp.lt.s32.totalorder %s18, 1
        %s706 = scalar_select %p705, %s18, 1
        %s707 = smul.addr %s706, 6
        %s708 = smul.addr %s707, 8
        %s709 = scalar_lea.vmem %s6, %s708
      $region56: #{_device_forward.3} parent=51 // pred_fallthru
        _
    $region52: #{_device_forward.3} parent=5 // pred_fallthru
      _
  $region6: #{_device_forward.3} parent=0 // loop_footer
    %s16 = sadd.s32 1, %s12
  $region7: #{_device_forward.3} parent=0 // loop_footer_branch
    %11 = sbr.rel target = $region3
  $region8: #{_device_forward.3} parent=0 // loop_exit
    _

</llo_original>
